<compile_context>
chip_gen: v5e
topology: v5e:2x2
jax: 0.10.0
libtpu: 0.0.40
codegen_flags: <defaults>
</compile_context>

<pallas_src>
import functools

import jax
import jax.numpy as jnp
from jax.experimental import pallas as pl
from jax.experimental.pallas import tpu as pltpu


def decoder1_kernel(x_ref, deg_ref, w_ref, b_ref, lane_deg_ref, sel_ref, out_ref):
    x = x_ref[...]                       # (TM, 2*F_in)   compute dtype
    deg = deg_ref[...]                   # (TM, 1)        int32
    # One wide matmul = all per-degree Linears for both packed streams.
    h = jnp.dot(x, w_ref[...], preferred_element_type=jnp.float32) + b_ref[...]
    h = jnp.maximum(h, 0.0)              # (TM, 2*D*C)    f32
    # Degree gate: a single vselect against the precomputed lane->degree map.
    h = jnp.where(lane_deg_ref[...] == deg, h, 0.0)
    # Collapse the D degree blocks of each stream with one narrow block-diagonal
    # matmul (MXU); result packs [out_n | out_s] -> lane-efficient (TM, 2*C) store.
    out_ref[...] = jnp.dot(h.astype(sel_ref.dtype), sel_ref[...],
                           preferred_element_type=jnp.float32).astype(out_ref.dtype)


def _pick_row_tile(M, block_rows):
    """Row tile: multiple of 8, capped at block_rows, >= 4 grid steps when M allows."""
    TM = block_rows
    while TM > 128 and M <= 2 * TM:
        TM //= 2
    if M < TM:
        TM = max(8, ((M + 7) // 8) * 8)
    return TM


@functools.partial(jax.jit, static_argnames=("block_rows", "compute_dtype"))
def decoder_1(neighbor_features, self_features, edges, W1, b1, W2, b2,
              *, block_rows=512, compute_dtype=jnp.bfloat16):
    """W1/W2: (max_degree, conv_width, input_dim) torch-Linear layout; b1/b2: (max_degree, conv_width)."""
    B, N, F_in = neighbor_features.shape
    D, C, _ = W1.shape

    # atom_degrees = (edges != -1).sum(-1)
    degrees = jnp.sum(edges != -1, axis=-1).astype(jnp.int32)        # (B, N)

    # Flatten (B, N) -> M rows; pack both streams side by side (cast + concat
    # fuse into a single XLA pass over the inputs).
    M = B * N
    x = jnp.concatenate(
        [neighbor_features.reshape(M, F_in), self_features.reshape(M, F_in)],
        axis=-1).astype(compute_dtype)                               # (M, 2*F_in)
    deg = degrees.reshape(M, 1)

    TM = _pick_row_tile(M, block_rows)
    M_pad = ((M + TM - 1) // TM) * TM
    if M_pad != M:
        pad = M_pad - M
        x = jnp.pad(x, ((0, pad), (0, 0)))
        # degree == D never matches a gate lane -> padded rows produce zeros.
        deg = jnp.pad(deg, ((0, pad), (0, 0)), constant_values=D)

    # Block-diagonal packed weights: W_blk[f, d*C + c] = W1[d, c, f] for stream 1
    # (rows [:F_in], cols [:D*C]); W2 occupies the opposite diagonal block.
    W1_all = jnp.transpose(W1, (2, 0, 1)).reshape(F_in, D * C)
    W2_all = jnp.transpose(W2, (2, 0, 1)).reshape(F_in, D * C)
    W_blk = jnp.zeros((2 * F_in, 2 * D * C), jnp.float32)
    W_blk = W_blk.at[:F_in, :D * C].set(W1_all)
    W_blk = W_blk.at[F_in:, D * C:].set(W2_all)
    W_blk = W_blk.astype(compute_dtype)

    # Bias stays f32 (added after the f32-accumulated matmul).
    b_all = jnp.concatenate([b1.reshape(-1), b2.reshape(-1)])[None, :].astype(jnp.float32)

    # Lane -> degree map (constant input; avoids per-step iota + integer divide).
    lane_deg = ((jnp.arange(2 * D * C, dtype=jnp.int32) % (D * C)) // C)[None, :]

    # Block-diagonal selection matrix collapsing the D degree blocks of each
    # stream into C output lanes: rows [:D*C] -> cols [:C], rows [D*C:] -> cols [C:].
    sel_half = jnp.tile(jnp.eye(C, dtype=jnp.float32), (D, 1))       # (D*C, C)
    sel = jnp.zeros((2 * D * C, 2 * C), jnp.float32)
    sel = sel.at[:D * C, :C].set(sel_half)
    sel = sel.at[D * C:, C:].set(sel_half)
    sel = sel.astype(compute_dtype)

    grid = (M_pad // TM,)
    out_packed = pl.pallas_call(
        decoder1_kernel,
        out_shape=jax.ShapeDtypeStruct((M_pad, 2 * C), jnp.float32),
        grid_spec=pltpu.PrefetchScalarGridSpec(
            num_scalar_prefetch=0,
            grid=grid,
            in_specs=[
                pl.BlockSpec((TM, 2 * F_in), lambda i: (i, 0)),
                pl.BlockSpec((TM, 1), lambda i: (i, 0)),
                # Constant index maps: fetched once, VMEM-resident across the grid.
                pl.BlockSpec((2 * F_in, 2 * D * C), lambda i: (0, 0)),
                pl.BlockSpec((1, 2 * D * C), lambda i: (0, 0)),
                pl.BlockSpec((1, 2 * D * C), lambda i: (0, 0)),
                pl.BlockSpec((2 * D * C, 2 * C), lambda i: (0, 0)),
            ],
            out_specs=pl.BlockSpec((TM, 2 * C), lambda i: (i, 0)),
        ),
        compiler_params=pltpu.CompilerParams(
            dimension_semantics=("parallel",),
        ),
    )(x, deg, W_blk, b_all, lane_deg, sel)

    # Only row padding (if any) is dropped; the split of the packed output is a
    # useful-size copy, not a pass over lane-padded data.
    out_packed = out_packed[:M].reshape(B, N, 2 * C)
    return out_packed[..., :C], out_packed[..., C:]


def decoder_1_ref(neighbor_features, self_features, edges, W1, b1, W2, b2):
    """Pure-JAX reference mirroring the torch forward pass exactly (f32)."""
    D, C, _ = W1.shape
    deg = jnp.sum(edges != -1, axis=-1, keepdims=True)               # (B, N, 1)
    out_n = jnp.zeros(neighbor_features.shape[:-1] + (C,), jnp.float32)
    out_s = jnp.zeros_like(out_n)
    for d in range(D):
        m = (deg == d).astype(jnp.float32)
        hn = jax.nn.relu(jnp.einsum("bnf,cf->bnc", neighbor_features, W1[d]) + b1[d])
        hs = jax.nn.relu(jnp.einsum("bnf,cf->bnc", self_features, W2[d]) + b2[d])
        out_n = out_n + m * hn
        out_s = out_s + m * hs
    return out_n, out_s


if __name__ == "__main__":
    key = jax.random.PRNGKey(0)
    B, N = 4, 128                                   # M = 512 -> TM = 128, grid = 4
    input_dim, conv_width, max_degree = 32, 32, 6

    k1, k2, k3, k4, k5, k6, k7, k8 = jax.random.split(key, 8)
    neighbor_features = jax.random.normal(k1, (B, N, input_dim), dtype=jnp.float32)
    self_features = jax.random.normal(k2, (B, N, input_dim), dtype=jnp.float32)

    # Padded edge lists: random degrees in [0, max_degree]; degree == max_degree
    # exercises the all-zero output path of the original module.
    deg_rand = jax.random.randint(k3, (B, N), 0, max_degree + 1)
    nbr = jax.random.randint(k4, (B, N, max_degree), 0, N)
    slot = jnp.arange(max_degree)
    edges = jnp.where(slot[None, None, :] < deg_rand[..., None], nbr, -1).astype(jnp.int32)

    # torch nn.Linear-style init: uniform(-1/sqrt(fan_in), 1/sqrt(fan_in)).
    bound = 1.0 / (input_dim ** 0.5)
    W1 = jax.random.uniform(k5, (max_degree, conv_width, input_dim), jnp.float32, -bound, bound)
    b1 = jax.random.uniform(k6, (max_degree, conv_width), jnp.float32, -bound, bound)
    W2 = jax.random.uniform(k7, (max_degree, conv_width, input_dim), jnp.float32, -bound, bound)
    b2 = jax.random.uniform(k8, (max_degree, conv_width), jnp.float32, -bound, bound)

    ref_n, ref_s = decoder_1_ref(neighbor_features, self_features, edges, W1, b1, W2, b2)

    # Default (bf16 operands, f32 accumulate) fast path.
    out_n, out_s = decoder_1(neighbor_features, self_features, edges, W1, b1, W2, b2)
    out_n, out_s = jax.block_until_ready((out_n, out_s))
    assert out_n.shape == (B, N, conv_width)
    assert out_s.shape == (B, N, conv_width)
    assert jnp.allclose(out_n, ref_n, atol=3e-2, rtol=3e-2), "neighbor output mismatch (bf16)"
    assert jnp.allclose(out_s, ref_s, atol=3e-2, rtol=3e-2), "self output mismatch (bf16)"

    # Bit-clean f32 path (validates the algorithm exactly).
    out_n32, out_s32 = decoder_1(neighbor_features, self_features, edges, W1, b1, W2, b2,
                                 compute_dtype=jnp.float32)
    out_n32, out_s32 = jax.block_until_ready((out_n32, out_s32))
    assert jnp.allclose(out_n32, ref_n, atol=1e-4, rtol=1e-4), "neighbor output mismatch (f32)"
    assert jnp.allclose(out_s32, ref_s, atol=1e-4, rtol=1e-4), "self output mismatch (f32)"

    print("KERNEL_OK")
</pallas_src>

<mosaic_0001>
module attributes {stable_mosaic.version = 11 : i64} {
  func.func @decoder1_kernel(%arg0: i32, %arg1: memref<128x64xbf16, #tpu.memory_space<vmem>>, %arg2: memref<128x1xi32, #tpu.memory_space<vmem>>, %arg3: memref<64x384xbf16, #tpu.memory_space<vmem>>, %arg4: memref<1x384xf32, #tpu.memory_space<vmem>>, %arg5: memref<1x384xi32, #tpu.memory_space<vmem>>, %arg6: memref<384x64xbf16, #tpu.memory_space<vmem>>, %arg7: memref<128x64xf32, #tpu.memory_space<vmem>>) attributes {dimension_semantics = [#tpu.dimension_semantics<parallel>], iteration_bounds = array<i64: 4>, scalar_prefetch = 0 : i64, scratch_operands = 0 : i64, tpu.core_type = #tpu.core_type<tc>, window_params = [{transform_indices = @transform_0, window_bounds = array<i64: 128, 64>}, {transform_indices = @transform_1, window_bounds = array<i64: 128, 1>}, {pipeline_mode = #tpu.pipeline_mode<synchronous>, transform_indices = @transform_2, window_bounds = array<i64: 64, 384>}, {pipeline_mode = #tpu.pipeline_mode<synchronous>, transform_indices = @transform_3, window_bounds = array<i64: 1, 384>}, {pipeline_mode = #tpu.pipeline_mode<synchronous>, transform_indices = @transform_4, window_bounds = array<i64: 1, 384>}, {pipeline_mode = #tpu.pipeline_mode<synchronous>, transform_indices = @transform_5, window_bounds = array<i64: 384, 64>}, {transform_indices = @transform_6, window_bounds = array<i64: 128, 64>}]} {
    %c0 = arith.constant 0 : index
    %c0_0 = arith.constant 0 : index
    %0 = vector.load %arg1[%c0, %c0_0] : memref<128x64xbf16, #tpu.memory_space<vmem>>, vector<128x64xbf16>
    %c0_1 = arith.constant 0 : index
    %c0_2 = arith.constant 0 : index
    %1 = vector.load %arg2[%c0_1, %c0_2] : memref<128x1xi32, #tpu.memory_space<vmem>>, vector<128x1xi32>
    %c0_3 = arith.constant 0 : index
    %c0_4 = arith.constant 0 : index
    %2 = vector.load %arg3[%c0_3, %c0_4] : memref<64x384xbf16, #tpu.memory_space<vmem>>, vector<64x384xbf16>
    %cst = arith.constant dense<0.000000e+00> : vector<128x384xf32>
    %3 = tpu.matmul %0, %2, %cst {dimension_numbers = #tpu.dot_dimension_numbers<[1], [0], [0], [1], [0, 0, 1, 1], [], []>} : vector<128x64xbf16>, vector<64x384xbf16>, vector<128x384xf32> -> vector<128x384xf32>
    %c0_5 = arith.constant 0 : index
    %c0_6 = arith.constant 0 : index
    %4 = vector.load %arg4[%c0_5, %c0_6] : memref<1x384xf32, #tpu.memory_space<vmem>>, vector<1x384xf32>
    %5 = vector.broadcast %4 : vector<1x384xf32> to vector<128x384xf32>
    %6 = arith.addf %3, %5 : vector<128x384xf32>
    %cst_7 = arith.constant 0.000000e+00 : f32
    %7 = vector.broadcast %cst_7 : f32 to vector<128x384xf32>
    %8 = arith.maximumf %6, %7 : vector<128x384xf32>
    %c0_8 = arith.constant 0 : index
    %c0_9 = arith.constant 0 : index
    %9 = vector.load %arg5[%c0_8, %c0_9] : memref<1x384xi32, #tpu.memory_space<vmem>>, vector<1x384xi32>
    %10 = vector.broadcast %9 : vector<1x384xi32> to vector<128x384xi32>
    %11 = vector.broadcast %1 : vector<128x1xi32> to vector<128x384xi32>
    %12 = arith.cmpi eq, %10, %11 : vector<128x384xi32>
    %cst_10 = arith.constant 0.000000e+00 : f32
    %13 = vector.broadcast %cst_10 : f32 to vector<128x384xf32>
    %14 = arith.select %12, %8, %13 : vector<128x384xi1>, vector<128x384xf32>
    %15 = arith.truncf %14 : vector<128x384xf32> to vector<128x384xbf16>
    %c0_11 = arith.constant 0 : index
    %c0_12 = arith.constant 0 : index
    %16 = vector.load %arg6[%c0_11, %c0_12] : memref<384x64xbf16, #tpu.memory_space<vmem>>, vector<384x64xbf16>
    %cst_13 = arith.constant dense<0.000000e+00> : vector<128x64xf32>
    %17 = tpu.matmul %15, %16, %cst_13 {dimension_numbers = #tpu.dot_dimension_numbers<[1], [0], [0], [1], [0, 0, 1, 1], [], []>} : vector<128x384xbf16>, vector<384x64xbf16>, vector<128x64xf32> -> vector<128x64xf32>
    %c0_14 = arith.constant 0 : index
    %c0_15 = arith.constant 0 : index
    %18 = vector.load %arg7[%c0_14, %c0_15] : memref<128x64xf32, #tpu.memory_space<vmem>>, vector<128x64xf32>
    tpu.vector_store %arg7[%c0_14, %c0_15], %17 {strides = array<i32>} : memref<128x64xf32, #tpu.memory_space<vmem>>, vector<128x64xf32>,
    return
  }
  func.func @transform_0(%arg0: i32) -> (i32, i32) {
    %c0_i32 = arith.constant 0 : i32
    %c0_i32_0 = arith.constant 0 : i32
    return %arg0, %c0_i32 : i32, i32
  }
  func.func @transform_1(%arg0: i32) -> (i32, i32) {
    %c0_i32 = arith.constant 0 : i32
    %c0_i32_0 = arith.constant 0 : i32
    return %arg0, %c0_i32 : i32, i32
  }
  func.func @transform_2(%arg0: i32) -> (i32, i32) {
    %c0_i32 = arith.constant 0 : i32
    %c0_i32_0 = arith.constant 0 : i32
    %c0_i32_1 = arith.constant 0 : i32
    return %c0_i32, %c0_i32_0 : i32, i32
  }
  func.func @transform_3(%arg0: i32) -> (i32, i32) {
    %c0_i32 = arith.constant 0 : i32
    %c0_i32_0 = arith.constant 0 : i32
    %c0_i32_1 = arith.constant 0 : i32
    return %c0_i32, %c0_i32_0 : i32, i32
  }
  func.func @transform_4(%arg0: i32) -> (i32, i32) {
    %c0_i32 = arith.constant 0 : i32
    %c0_i32_0 = arith.constant 0 : i32
    %c0_i32_1 = arith.constant 0 : i32
    return %c0_i32, %c0_i32_0 : i32, i32
  }
  func.func @transform_5(%arg0: i32) -> (i32, i32) {
    %c0_i32 = arith.constant 0 : i32
    %c0_i32_0 = arith.constant 0 : i32
    %c0_i32_1 = arith.constant 0 : i32
    return %c0_i32, %c0_i32_0 : i32, i32
  }
  func.func @transform_6(%arg0: i32) -> (i32, i32) {
    %c0_i32 = arith.constant 0 : i32
    %c0_i32_0 = arith.constant 0 : i32
    return %arg0, %c0_i32 : i32, i32
  }
}

</mosaic_0001>

<llo_original>
// kernel: decoder_1.1
$region0: #{decoder_1.1}
  #allocation0 [shape = 'u32[]', space=smem, size = 0x4, offset = 0x4, fixed_abs, tag = 'smem constant byte address 0x4 - core index']
  #allocation1 [shape = 'u32[72,128]{1,0:T(1,128)}', space=vmem, size = 0x9000, scoped, tag = 'internal scratch']
  %s0 = inlined_call_operand.vmem [shape: bf16[512,64], index: 0, kind: input, shape index: {}]
  %s1 = inlined_call_operand.vmem [shape: s32[512,1], index: 1, kind: input, shape index: {}]
  %s2 = inlined_call_operand.vmem [shape: bf16[64,384], index: 2, kind: input, shape index: {}]
  %s3 = inlined_call_operand.vmem [shape: f32[1,384], index: 3, kind: input, shape index: {}]
  %s4 = inlined_call_operand.vmem [shape: s32[1,384], index: 4, kind: input, shape index: {}]
  %s5 = inlined_call_operand.vmem [shape: bf16[384,64], index: 5, kind: input, shape index: {}]
  %s6 = inlined_call_operand.vmem [shape: f32[512,64], index: 6, kind: output, shape index: {}]
  %s7 = sld [smem:[#allocation0]]
  $region57: #{decoder_1.1} parent=0
    _
  %s9 = ssub.s32 1, %s7
  %s10 = scalar_select 0, %s9, %s7
  loop: start=0, step=1, limit=6
  $region2: #{decoder_1.1} parent=0 // loop_pre_header
    _
  $region3: #{decoder_1.1} parent=0 // loop_header
    %s12 = sphi 0, %s16
    %p13 = scmp.ge.s32.totalorder %s12, 6
    %s22 = sphi 0, %s24
    %s25 = sphi 0, %s22
    %s26 = sphi 0, %s25
    %s42 = sphi 0, %s26
    %s48 = sphi 0, %s50
    %s51 = sphi 0, %s48
    %s52 = sphi 0, %s51
    %s68 = sphi 0, %s52
    %s72 = sphi 0, %s72
    %s74 = sphi 0, %s72
    %s75 = sphi 0, %s74
    %s89 = sphi 0, %s75
    %s93 = sphi 0, %s93
    %s95 = sphi 0, %s93
    %s96 = sphi 0, %s95
    %s110 = sphi 0, %s96
    %s114 = sphi 0, %s114
    %s116 = sphi 0, %s114
    %s117 = sphi 0, %s116
    %s131 = sphi 0, %s117
    %s135 = sphi 0, %s135
    %s137 = sphi 0, %s135
    %s138 = sphi 0, %s137
    %s152 = sphi 0, %s138
    %s158 = sphi 0, %s160
    %s161 = sphi 0, %s158
    %s162 = sphi 0, %s161
    %s178 = sphi 0, %s162
  $region4: #{decoder_1.1} parent=0 // loop_header_branch
    %15 = sbr.rel (%p13) target = $region8
  $region5: #{decoder_1.1} parent=0 // loop_body
    %s17 = ssub.s32 %s12, 1
    %s18 = ssub.s32 %s12, 2
    %s19 = sadd.s32 %s12, 1
    %s20 = ssub.s32 %s12, %s19
    %p21 = scmp.eq.s32.totalorder %s20, 0
    %s23 = sadd.s32 %s22, 1
    %s24 = scalar_select %p21, %s22, %s23
    %p27 = pneg %p21
    %p28 = scmp.eq.s32.totalorder %s12, 3
    %p29 = por %p27, %p28
    %p30 = scmp.ne.s32.totalorder %s22, %s25
    %p31 = scmp.eq.s32.totalorder %s12, 0
    %p32 = por %p30, %p31
    %p33 = scmp.ne.s32.totalorder %s22, %s25
    %p34 = scmp.eq.s32.totalorder %s17, 3
    %p35 = por %p33, %p34
    %p36 = scmp.ne.s32.totalorder %s25, %s26
    %p37 = scmp.eq.s32.totalorder %s17, 0
    %p38 = por %p36, %p37
    %p39 = scmp.ne.s32.totalorder %s25, %s26
    %p40 = scmp.eq.s32.totalorder %s18, 3
    %p41 = por %p39, %p40
    %p43 = scmp.ne.s32.totalorder %s26, %s42
    %p44 = scmp.eq.s32.totalorder %s18, 0
    %p45 = por %p43, %p44
    %s46 = ssub.s32 %s12, %s19
    %p47 = scmp.eq.s32.totalorder %s46, 0
    %s49 = sadd.s32 %s48, 1
    %s50 = scalar_select %p47, %s48, %s49
    %p53 = pneg %p47
    %p54 = scmp.eq.s32.totalorder %s12, 3
    %p55 = por %p53, %p54
    %p56 = scmp.ne.s32.totalorder %s48, %s51
    %p57 = scmp.eq.s32.totalorder %s12, 0
    %p58 = por %p56, %p57
    %p59 = scmp.ne.s32.totalorder %s48, %s51
    %p60 = scmp.eq.s32.totalorder %s17, 3
    %p61 = por %p59, %p60
    %p62 = scmp.ne.s32.totalorder %s51, %s52
    %p63 = scmp.eq.s32.totalorder %s17, 0
    %p64 = por %p62, %p63
    %p65 = scmp.ne.s32.totalorder %s51, %s52
    %p66 = scmp.eq.s32.totalorder %s18, 3
    %p67 = por %p65, %p66
    %p69 = scmp.ne.s32.totalorder %s52, %s68
    %p70 = scmp.eq.s32.totalorder %s18, 0
    %p71 = por %p69, %p70
    %s73 = sadd.s32 %s72, 1
    %p76 = scmp.eq.s32.totalorder %s12, 3
    %p77 = scmp.ne.s32.totalorder %s72, %s74
    %p78 = scmp.eq.s32.totalorder %s12, 0
    %p79 = por %p77, %p78
    %p80 = scmp.ne.s32.totalorder %s72, %s74
    %p81 = scmp.eq.s32.totalorder %s17, 3
    %p82 = por %p80, %p81
    %p83 = scmp.ne.s32.totalorder %s74, %s75
    %p84 = scmp.eq.s32.totalorder %s17, 0
    %p85 = por %p83, %p84
    %p86 = scmp.ne.s32.totalorder %s74, %s75
    %p87 = scmp.eq.s32.totalorder %s18, 3
    %p88 = por %p86, %p87
    %p90 = scmp.ne.s32.totalorder %s75, %s89
    %p91 = scmp.eq.s32.totalorder %s18, 0
    %p92 = por %p90, %p91
    %s94 = sadd.s32 %s93, 1
    %p97 = scmp.eq.s32.totalorder %s12, 3
    %p98 = scmp.ne.s32.totalorder %s93, %s95
    %p99 = scmp.eq.s32.totalorder %s12, 0
    %p100 = por %p98, %p99
    %p101 = scmp.ne.s32.totalorder %s93, %s95
    %p102 = scmp.eq.s32.totalorder %s17, 3
    %p103 = por %p101, %p102
    %p104 = scmp.ne.s32.totalorder %s95, %s96
    %p105 = scmp.eq.s32.totalorder %s17, 0
    %p106 = por %p104, %p105
    %p107 = scmp.ne.s32.totalorder %s95, %s96
    %p108 = scmp.eq.s32.totalorder %s18, 3
    %p109 = por %p107, %p108
    %p111 = scmp.ne.s32.totalorder %s96, %s110
    %p112 = scmp.eq.s32.totalorder %s18, 0
    %p113 = por %p111, %p112
    %s115 = sadd.s32 %s114, 1
    %p118 = scmp.eq.s32.totalorder %s12, 3
    %p119 = scmp.ne.s32.totalorder %s114, %s116
    %p120 = scmp.eq.s32.totalorder %s12, 0
    %p121 = por %p119, %p120
    %p122 = scmp.ne.s32.totalorder %s114, %s116
    %p123 = scmp.eq.s32.totalorder %s17, 3
    %p124 = por %p122, %p123
    %p125 = scmp.ne.s32.totalorder %s116, %s117
    %p126 = scmp.eq.s32.totalorder %s17, 0
    %p127 = por %p125, %p126
    %p128 = scmp.ne.s32.totalorder %s116, %s117
    %p129 = scmp.eq.s32.totalorder %s18, 3
    %p130 = por %p128, %p129
    %p132 = scmp.ne.s32.totalorder %s117, %s131
    %p133 = scmp.eq.s32.totalorder %s18, 0
    %p134 = por %p132, %p133
    %s136 = sadd.s32 %s135, 1
    %p139 = scmp.eq.s32.totalorder %s12, 3
    %p140 = scmp.ne.s32.totalorder %s135, %s137
    %p141 = scmp.eq.s32.totalorder %s12, 0
    %p142 = por %p140, %p141
    %p143 = scmp.ne.s32.totalorder %s135, %s137
    %p144 = scmp.eq.s32.totalorder %s17, 3
    %p145 = por %p143, %p144
    %p146 = scmp.ne.s32.totalorder %s137, %s138
    %p147 = scmp.eq.s32.totalorder %s17, 0
    %p148 = por %p146, %p147
    %p149 = scmp.ne.s32.totalorder %s137, %s138
    %p150 = scmp.eq.s32.totalorder %s18, 3
    %p151 = por %p149, %p150
    %p153 = scmp.ne.s32.totalorder %s138, %s152
    %p154 = scmp.eq.s32.totalorder %s18, 0
    %p155 = por %p153, %p154
    %s156 = ssub.s32 %s12, %s19
    %p157 = scmp.eq.s32.totalorder %s156, 0
    %s159 = sadd.s32 %s158, 1
    %s160 = scalar_select %p157, %s158, %s159
    %p163 = pneg %p157
    %p164 = scmp.eq.s32.totalorder %s12, 3
    %p165 = por %p163, %p164
    %p166 = scmp.ne.s32.totalorder %s158, %s161
    %p167 = scmp.eq.s32.totalorder %s12, 0
    %p168 = por %p166, %p167
    %p169 = scmp.ne.s32.totalorder %s158, %s161
    %p170 = scmp.eq.s32.totalorder %s17, 3
    %p171 = por %p169, %p170
    %p172 = scmp.ne.s32.totalorder %s161, %s162
    %p173 = scmp.eq.s32.totalorder %s17, 0
    %p174 = por %p172, %p173
    %p175 = scmp.ne.s32.totalorder %s161, %s162
    %p176 = scmp.eq.s32.totalorder %s18, 3
    %p177 = por %p175, %p176
    %p179 = scmp.ne.s32.totalorder %s162, %s178
    %p180 = scmp.eq.s32.totalorder %s18, 0
    %p181 = por %p179, %p180
    %p182 = scmp.le.s32.totalorder 1, %s12
    %p183 = scmp.lt.s32.totalorder %s12, 5
    %p184 = pnand %p182, %p183
    %p185 = pneg %p184
    // Predicated region
    $region9: #{decoder_1.1} parent=5 // pred_check
      _
    $region10: #{decoder_1.1} parent=5 // pred_check_branch
      %187 = sbr.rel (%p184) target = $region12
    $region11: #{decoder_1.1} parent=5 // pred_region
      %s188 = ssub.s32 %s12, 1
      // Predicated region
      $region13: #{decoder_1.1} parent=11 // pred_check
        %p189 = pneg %p85
      $region14: #{decoder_1.1} parent=11 // pred_check_branch
        %191 = sbr.rel (%p189) target = $region16
      $region15: #{decoder_1.1} parent=11 // pred_region
        _
      $region16: #{decoder_1.1} parent=11 // pred_fallthru
        _
      // Predicated region
      $region17: #{decoder_1.1} parent=11 // pred_check
        %p192 = pneg %p106
      $region18: #{decoder_1.1} parent=11 // pred_check_branch
        %194 = sbr.rel (%p192) target = $region20
      $region19: #{decoder_1.1} parent=11 // pred_region
        _
      $region20: #{decoder_1.1} parent=11 // pred_fallthru
        _
      // Predicated region
      $region21: #{decoder_1.1} parent=11 // pred_check
        %p195 = pneg %p127
      $region22: #{decoder_1.1} parent=11 // pred_check_branch
        %197 = sbr.rel (%p195) target = $region24
      $region23: #{decoder_1.1} parent=11 // pred_region
        _
      $region24: #{decoder_1.1} parent=11 // pred_fallthru
        _
      // Predicated region
      $region25: #{decoder_1.1} parent=11 // pred_check
        %p198 = pneg %p148
      $region26: #{decoder_1.1} parent=11 // pred_check_branch
        %200 = sbr.rel (%p198) target = $region28
      $region27: #{decoder_1.1} parent=11 // pred_region
        _
      $region28: #{decoder_1.1} parent=11 // pred_fallthru
        _
    $region12: #{decoder_1.1} parent=5 // pred_fallthru
      _
    %p201 = scmp.lt.s32.totalorder %s12, 4
    // Predicated region
    $region29: #{decoder_1.1} parent=5 // pred_check
      %p202 = pneg %p201
    $region30: #{decoder_1.1} parent=5 // pred_check_branch
      %204 = sbr.rel (%p202) target = $region32
    $region31: #{decoder_1.1} parent=5 // pred_region
      // Predicated region
      $region33: #{decoder_1.1} parent=31 // pred_check
        %p205 = pneg %p32
      $region34: #{decoder_1.1} parent=31 // pred_check_branch
        %207 = sbr.rel (%p205) target = $region36
      $region35: #{decoder_1.1} parent=31 // pred_region
        %s208 = smul.u32 16, %s12
        %p209 = scmp.lt.s32.totalorder %s208, 63
        %s210 = scalar_select %p209, %s208, 63
        %s211 = smul.addr %s210, 4
        %s212 = scalar_lea.vmem %s0, %s211
        %s213 = smul.u32 16, %s12
      $region36: #{decoder_1.1} parent=31 // pred_fallthru
        _
      // Predicated region
      $region37: #{decoder_1.1} parent=31 // pred_check
        %p214 = pneg %p58
      $region38: #{decoder_1.1} parent=31 // pred_check_branch
        %216 = sbr.rel (%p214) target = $region40
      $region39: #{decoder_1.1} parent=31 // pred_region
        %s217 = smul.u32 16, %s12
        %p218 = scmp.lt.s32.totalorder %s217, 63
        %s219 = scalar_select %p218, %s217, 63
        %s220 = smul.addr %s219, 8
        %s221 = scalar_lea.vmem %s1, %s220
        %s222 = smul.u32 16, %s12
      $region40: #{decoder_1.1} parent=31 // pred_fallthru
        _
    $region32: #{decoder_1.1} parent=5 // pred_fallthru
      _
    %p223 = scmp.le.s32.totalorder 1, %s12
    %p224 = scmp.lt.s32.totalorder %s12, 5
    %p225 = pnand %p223, %p224
    %p226 = pneg %p225
    // Predicated region
    $region41: #{decoder_1.1} parent=5 // pred_check
      _
    $region42: #{decoder_1.1} parent=5 // pred_check_branch
      %228 = sbr.rel (%p225) target = $region44
    $region43: #{decoder_1.1} parent=5 // pred_region
      %s229 = ssub.s32 %s12, 1
      %s230 = smul.u32 16, %s17
      %p231 = scmp.lt.s32.totalorder %s230, 63
      %s232 = scalar_select %p231, %s230, 63
      %s233 = smul.addr %s232, 4
      %s234 = scalar_lea.vmem %s0, %s233
      %p235 = pneg %p38
      %p236 = pneg %p35
      %s237 = smul.u32 16, %s17
      %p238 = scmp.lt.s32.totalorder %s237, 63
      %s239 = scalar_select %p238, %s237, 63
      %s240 = smul.addr %s239, 8
      %s241 = scalar_lea.vmem %s1, %s240
      %p242 = pneg %p64
      %p243 = pneg %p61
      %p244 = pneg %p85
      %p245 = pneg %p82
      %p246 = pneg %p106
      %p247 = pneg %p103
      %p248 = pneg %p127
      %p249 = pneg %p124
      %p250 = pneg %p148
      %p251 = pneg %p145
      %p252 = pneg %p174
      %p253 = pneg %p171
      %s254 = smul.u32 16, %s17
      %p255 = scmp.lt.s32.totalorder %s254, 63
      %s256 = scalar_select %p255, %s254, 63
      %s257 = smul.addr %s256, 8
      %s258 = scalar_lea.vmem %s6, %s257
      %s259 = smul.u32 16, %s17
      %p260 = scmp.lt.s32.totalorder %s259, 63
      %s261 = scalar_select %p260, %s259, 63
      %s262 = smul.addr %s261, 4
      %s263 = scalar_lea.vmem %s0, %s262
      %s264 = smul.u32 16, %s17
      %s265 = smul.u32 16, %s17
      %p266 = scmp.lt.s32.totalorder %s265, 63
      %s267 = scalar_select %p266, %s265, 63
      %s268 = smul.addr %s267, 8
      %s269 = scalar_lea.vmem %s1, %s268
      %s270 = smul.u32 16, %s17
      %s271 = smul.u32 16, %s17
      %p272 = scmp.lt.s32.totalorder %s271, 63
      %s273 = scalar_select %p272, %s271, 63
      %s274 = smul.addr %s273, 8
      %s275 = scalar_lea.vmem %s6, %s274
      %s276 = smul.u32 16, %s17
      %v278 = vld [vmem:[%s263] sm:$0xf]
      %v279 = vld [vmem:[%s263 + $0x4] sm:$0xf]
      %v280 = vld [vmem:[%s263 + $0x8] sm:$0xf]
      %v281 = vld [vmem:[%s263 + $0xc] sm:$0xf]
      %v282 = vld [vmem:[%s263 + $0x10] sm:$0xf]
      %v283 = vld [vmem:[%s263 + $0x14] sm:$0xf]
      %v284 = vld [vmem:[%s263 + $0x18] sm:$0xf]
      %v285 = vld [vmem:[%s263 + $0x1c] sm:$0xf]
      %v286 = vld [vmem:[%s263 + $0x20] sm:$0xf]
      %v287 = vld [vmem:[%s263 + $0x24] sm:$0xf]
      %v288 = vld [vmem:[%s263 + $0x28] sm:$0xf]
      %v289 = vld [vmem:[%s263 + $0x2c] sm:$0xf]
      %v290 = vld [vmem:[%s263 + $0x30] sm:$0xf]
      %v291 = vld [vmem:[%s263 + $0x34] sm:$0xf]
      %v292 = vld [vmem:[%s263 + $0x38] sm:$0xf]
      %v293 = vld [vmem:[%s263 + $0x3c] sm:$0xf]
      %v294 = vld [vmem:[%s269] sm:$0xff]
      %v295 = vld [vmem:[%s269 + $0x8] sm:$0xff]
      %v296 = vld [vmem:[%s269 + $0x10] sm:$0xff]
      %v297 = vld [vmem:[%s269 + $0x18] sm:$0xff]
      %v298 = vld [vmem:[%s269 + $0x20] sm:$0xff]
      %v299 = vld [vmem:[%s269 + $0x28] sm:$0xff]
      %v300 = vld [vmem:[%s269 + $0x30] sm:$0xff]
      %v301 = vld [vmem:[%s269 + $0x38] sm:$0xff]
      %v302 = vld [vmem:[%s269 + $0x40] sm:$0xff]
      %v303 = vld [vmem:[%s269 + $0x48] sm:$0xff]
      %v304 = vld [vmem:[%s269 + $0x50] sm:$0xff]
      %v305 = vld [vmem:[%s269 + $0x58] sm:$0xff]
      %v306 = vld [vmem:[%s269 + $0x60] sm:$0xff]
      %v307 = vld [vmem:[%s269 + $0x68] sm:$0xff]
      %v308 = vld [vmem:[%s269 + $0x70] sm:$0xff]
      %v309 = vld [vmem:[%s269 + $0x78] sm:$0xff]
      %v310 = vld [vmem:[%s2] sm:$0xff]
      %v311 = vld [vmem:[%s2 + $0x8] sm:$0xf]
      %v312 = vld [vmem:[%s2 + $0xc] sm:$0xff]
      %v313 = vld [vmem:[%s2 + $0x14] sm:$0xf]
      %v314 = vld [vmem:[%s2 + $0x18] sm:$0xff]
      %v315 = vld [vmem:[%s2 + $0x20] sm:$0xf]
      %v316 = vld [vmem:[%s2 + $0x24] sm:$0xff]
      %v317 = vld [vmem:[%s2 + $0x2c] sm:$0xf]
      %v318 = vld [vmem:[%s2 + $0x30] sm:$0xff]
      %v319 = vld [vmem:[%s2 + $0x38] sm:$0xf]
      %v320 = vld [vmem:[%s2 + $0x3c] sm:$0xff]
      %v321 = vld [vmem:[%s2 + $0x44] sm:$0xf]
      %v322 = vld [vmem:[%s2 + $0x48] sm:$0xff]
      %v323 = vld [vmem:[%s2 + $0x50] sm:$0xf]
      %v324 = vld [vmem:[%s2 + $0x54] sm:$0xff]
      %v325 = vld [vmem:[%s2 + $0x5c] sm:$0xf]
      %v326 = vld [vmem:[%s3] sm:$0x7]
      %v328 = vperm.slane %v326, 0
      %v329 = vperm.slane %v326, 1
      %v330 = vperm.slane %v326, 2
      %v350 = vunpack.c.l.b16 %v278
      %v351 = vunpack.c.l.b16 %v279
      %v352 = vunpack.c.l.b16 %v280
      %v353 = vunpack.c.l.b16 %v281
      %v354 = vunpack.c.l.b16 %v282
      %v355 = vunpack.c.l.b16 %v283
      %v356 = vunpack.c.l.b16 %v284
      %v357 = vunpack.c.l.b16 %v285
      %v358 = vunpack.c.l.b16 %v286
      %v359 = vunpack.c.l.b16 %v287
      %v360 = vunpack.c.l.b16 %v288
      %v361 = vunpack.c.l.b16 %v289
      %v362 = vunpack.c.l.b16 %v290
      %v363 = vunpack.c.l.b16 %v291
      %v364 = vunpack.c.l.b16 %v292
      %v365 = vunpack.c.l.b16 %v293
      %v366 = vpack.c.b16 %v351, %v350
      %v367 = vpack.c.b16 %v353, %v352
      %v368 = vpack.c.b16 %v355, %v354
      %v369 = vpack.c.b16 %v357, %v356
      %v370 = vpack.c.b16 %v359, %v358
      %v371 = vpack.c.b16 %v361, %v360
      %v372 = vpack.c.b16 %v363, %v362
      %v373 = vpack.c.b16 %v365, %v364
      %v390 = vunpack.c.l.b16 %v310
      %v391 = vunpack.c.h.b16 %v310
      %v392 = vunpack.c.l.b16 %v311
      %v393 = vunpack.c.l.b16 %v312
      %v394 = vunpack.c.h.b16 %v312
      %v395 = vunpack.c.l.b16 %v313
      %v396 = vunpack.c.l.b16 %v314
      %v397 = vunpack.c.h.b16 %v314
      %v398 = vunpack.c.l.b16 %v315
      %v399 = vunpack.c.l.b16 %v316
      %v400 = vunpack.c.h.b16 %v316
      %v401 = vunpack.c.l.b16 %v317
      %v402 = vunpack.c.l.b16 %v318
      %v403 = vunpack.c.h.b16 %v318
      %v404 = vunpack.c.l.b16 %v319
      %v405 = vunpack.c.l.b16 %v320
      %v406 = vunpack.c.h.b16 %v320
      %v407 = vunpack.c.l.b16 %v321
      %v408 = vunpack.c.l.b16 %v322
      %v409 = vunpack.c.h.b16 %v322
      %v410 = vunpack.c.l.b16 %v323
      %v411 = vunpack.c.l.b16 %v324
      %v412 = vunpack.c.h.b16 %v324
      %v413 = vunpack.c.l.b16 %v325
      %v414 = vpack.c.b16 %v393, %v390
      %v415 = vpack.c.b16 %v394, %v391
      %v416 = vpack.c.b16 %v395, %v392
      %v417 = vpack.c.b16 %v399, %v396
      %v418 = vpack.c.b16 %v400, %v397
      %v419 = vpack.c.b16 %v401, %v398
      %v420 = vpack.c.b16 %v405, %v402
      %v421 = vpack.c.b16 %v406, %v403
      %v422 = vpack.c.b16 %v407, %v404
      %v423 = vpack.c.b16 %v411, %v408
      %v424 = vpack.c.b16 %v412, %v409
      %v425 = vpack.c.b16 %v413, %v410
      %vm438 = vcmask 523264
      %v440 = vsel %vm438, %v366, 0
      %v443 = vsel %vm438, %v367, 0
      %v446 = vsel %vm438, %v368, 0
      %v449 = vsel %vm438, %v369, 0
      %v452 = vsel %vm438, %v370, 0
      %v455 = vsel %vm438, %v371, 0
      %v458 = vsel %vm438, %v372, 0
      %v461 = vsel %vm438, %v373, 0
      %463 = vmatpush.bf16.msra.mxu0 0
      %464 = vmatpush.bf16.msra.mxu0 0
      %465 = vmatpush.bf16.msra.mxu0 0
      %466 = vmatpush.bf16.msra.mxu0 0
      %467 = vmatpush.bf16.msra.mxu0 %v423
      %468 = vmatpush.bf16.msra.mxu0 %v420
      %469 = vmatpush.bf16.msra.mxu0 %v417
      %470 = vmatpush.bf16.msra.mxu0 %v414
      %471 = vmatmul.bf16.gmra.mxu0 %v440
      %v472 = vpop.f32.mrf.mxu0
      %v473 = vadd.f32 %v328, %v472
      %v474 = vpop.f32.mrf.mxu0
      %v475 = vadd.f32 %v328, %v474
      %476 = vmatmul.bf16.gmra.mxu0 %v443
      %v477 = vpop.f32.mrf.mxu0
      %v478 = vadd.f32 %v328, %v477
      %v479 = vpop.f32.mrf.mxu0
      %v480 = vadd.f32 %v328, %v479
      %481 = vmatmul.bf16.gmra.mxu0 %v446
      %v482 = vpop.f32.mrf.mxu0
      %v483 = vadd.f32 %v328, %v482
      %v484 = vpop.f32.mrf.mxu0
      %v485 = vadd.f32 %v328, %v484
      %486 = vmatmul.bf16.gmra.mxu0 %v449
      %v487 = vpop.f32.mrf.mxu0
      %v488 = vadd.f32 %v328, %v487
      %v489 = vpop.f32.mrf.mxu0
      %v490 = vadd.f32 %v328, %v489
      %491 = vmatmul.bf16.gmra.mxu0 %v452
      %v492 = vpop.f32.mrf.mxu0
      %v493 = vadd.f32 %v328, %v492
      %v494 = vpop.f32.mrf.mxu0
      %v495 = vadd.f32 %v328, %v494
      %496 = vmatmul.bf16.gmra.mxu0 %v455
      %v497 = vpop.f32.mrf.mxu0
      %v498 = vadd.f32 %v328, %v497
      %v499 = vpop.f32.mrf.mxu0
      %v500 = vadd.f32 %v328, %v499
      %501 = vmatmul.bf16.gmra.mxu0 %v458
      %v502 = vpop.f32.mrf.mxu0
      %v503 = vadd.f32 %v328, %v502
      %v504 = vpop.f32.mrf.mxu0
      %v505 = vadd.f32 %v328, %v504
      %506 = vmatmul.bf16.gmra.mxu0 %v461
      %v507 = vpop.f32.mrf.mxu0
      %v508 = vadd.f32 %v328, %v507
      %v509 = vpop.f32.mrf.mxu0
      %v510 = vadd.f32 %v328, %v509
      %511 = vdwg.mxu0
      %512 = vmatpush.bf16.msra.mxu0 0
      %513 = vmatpush.bf16.msra.mxu0 0
      %514 = vmatpush.bf16.msra.mxu0 0
      %515 = vmatpush.bf16.msra.mxu0 0
      %516 = vmatpush.bf16.msra.mxu0 %v424
      %517 = vmatpush.bf16.msra.mxu0 %v421
      %518 = vmatpush.bf16.msra.mxu0 %v418
      %519 = vmatpush.bf16.msra.mxu0 %v415
      %520 = vmatmul.bf16.gmra.mxu0 %v440
      %v521 = vpop.f32.mrf.mxu0
      %v522 = vadd.f32 %v329, %v521
      %v523 = vpop.f32.mrf.mxu0
      %v524 = vadd.f32 %v329, %v523
      %525 = vmatmul.bf16.gmra.mxu0 %v443
      %v526 = vpop.f32.mrf.mxu0
      %v527 = vadd.f32 %v329, %v526
      %v528 = vpop.f32.mrf.mxu0
      %v529 = vadd.f32 %v329, %v528
      %530 = vmatmul.bf16.gmra.mxu0 %v446
      %v531 = vpop.f32.mrf.mxu0
      %v532 = vadd.f32 %v329, %v531
      %v533 = vpop.f32.mrf.mxu0
      %v534 = vadd.f32 %v329, %v533
      %535 = vmatmul.bf16.gmra.mxu0 %v449
      %v536 = vpop.f32.mrf.mxu0
      %v537 = vadd.f32 %v329, %v536
      %v538 = vpop.f32.mrf.mxu0
      %v539 = vadd.f32 %v329, %v538
      %540 = vmatmul.bf16.gmra.mxu0 %v452
      %v541 = vpop.f32.mrf.mxu0
      %v542 = vadd.f32 %v329, %v541
      %v543 = vpop.f32.mrf.mxu0
      %v544 = vadd.f32 %v329, %v543
      %545 = vmatmul.bf16.gmra.mxu0 %v455
      %v546 = vpop.f32.mrf.mxu0
      %v547 = vadd.f32 %v329, %v546
      %v548 = vpop.f32.mrf.mxu0
      %v549 = vadd.f32 %v329, %v548
      %550 = vmatmul.bf16.gmra.mxu0 %v458
      %v551 = vpop.f32.mrf.mxu0
      %v552 = vadd.f32 %v329, %v551
      %v553 = vpop.f32.mrf.mxu0
      %v554 = vadd.f32 %v329, %v553
      %555 = vmatmul.bf16.gmra.mxu0 %v461
      %v556 = vpop.f32.mrf.mxu0
      %v557 = vadd.f32 %v329, %v556
      %v558 = vpop.f32.mrf.mxu0
      %v559 = vadd.f32 %v329, %v558
      %560 = vdwg.mxu0
      %561 = vmatpush.bf16.msra.mxu0 0
      %562 = vmatpush.bf16.msra.mxu0 0
      %563 = vmatpush.bf16.msra.mxu0 0
      %564 = vmatpush.bf16.msra.mxu0 0
      %565 = vmatpush.bf16.msra.mxu0 %v425
      %566 = vmatpush.bf16.msra.mxu0 %v422
      %567 = vmatpush.bf16.msra.mxu0 %v419
      %568 = vmatpush.bf16.msra.mxu0 %v416
      %569 = vmatmul.bf16.gmra.mxu0 %v440
      %v570 = vpop.f32.mrf.mxu0
      %v571 = vadd.f32 %v330, %v570
      %v572 = vpop.f32.mrf.mxu0
      %v573 = vadd.f32 %v330, %v572
      %574 = vmatmul.bf16.gmra.mxu0 %v443
      %v575 = vpop.f32.mrf.mxu0
      %v576 = vadd.f32 %v330, %v575
      %v577 = vpop.f32.mrf.mxu0
      %v578 = vadd.f32 %v330, %v577
      %579 = vmatmul.bf16.gmra.mxu0 %v446
      %v580 = vpop.f32.mrf.mxu0
      %v581 = vadd.f32 %v330, %v580
      %v582 = vpop.f32.mrf.mxu0
      %v583 = vadd.f32 %v330, %v582
      %584 = vmatmul.bf16.gmra.mxu0 %v449
      %v585 = vpop.f32.mrf.mxu0
      %v586 = vadd.f32 %v330, %v585
      %v587 = vpop.f32.mrf.mxu0
      %v588 = vadd.f32 %v330, %v587
      %589 = vmatmul.bf16.gmra.mxu0 %v452
      %v590 = vpop.f32.mrf.mxu0
      %v591 = vadd.f32 %v330, %v590
      %v592 = vpop.f32.mrf.mxu0
      %v593 = vadd.f32 %v330, %v592
      %594 = vmatmul.bf16.gmra.mxu0 %v455
      %v595 = vpop.f32.mrf.mxu0
      %v596 = vadd.f32 %v330, %v595
      %v597 = vpop.f32.mrf.mxu0
      %v598 = vadd.f32 %v330, %v597
      %599 = vmatmul.bf16.gmra.mxu0 %v458
      %v600 = vpop.f32.mrf.mxu0
      %v601 = vadd.f32 %v330, %v600
      %v602 = vpop.f32.mrf.mxu0
      %v603 = vadd.f32 %v330, %v602
      %604 = vmatmul.bf16.gmra.mxu0 %v461
      %v605 = vpop.f32.mrf.mxu0
      %v606 = vadd.f32 %v330, %v605
      %v607 = vpop.f32.mrf.mxu0
      %v608 = vadd.f32 %v330, %v607
      %609 = vdwg.mxu0
      %v610 = vmax.f32 %v473, 0.0
      %v611 = vmax.f32 %v522, 0.0
      %v612 = vmax.f32 %v571, 0.0
      %v613 = vmax.f32 %v475, 0.0
      %v614 = vmax.f32 %v524, 0.0
      %v615 = vmax.f32 %v573, 0.0
      %v616 = vmax.f32 %v478, 0.0
      %v617 = vmax.f32 %v527, 0.0
      %v618 = vmax.f32 %v576, 0.0
      %v619 = vmax.f32 %v480, 0.0
      %v620 = vmax.f32 %v529, 0.0
      %v621 = vmax.f32 %v578, 0.0
      %v622 = vmax.f32 %v483, 0.0
      %v623 = vmax.f32 %v532, 0.0
      %v624 = vmax.f32 %v581, 0.0
      %v625 = vmax.f32 %v485, 0.0
      %v626 = vmax.f32 %v534, 0.0
      %v627 = vmax.f32 %v583, 0.0
      %v628 = vmax.f32 %v488, 0.0
      %v629 = vmax.f32 %v537, 0.0
      %v630 = vmax.f32 %v586, 0.0
      %v631 = vmax.f32 %v490, 0.0
      %v632 = vmax.f32 %v539, 0.0
      %v633 = vmax.f32 %v588, 0.0
      %v634 = vmax.f32 %v493, 0.0
      %v635 = vmax.f32 %v542, 0.0
      %v636 = vmax.f32 %v591, 0.0
      %v637 = vmax.f32 %v495, 0.0
      %v638 = vmax.f32 %v544, 0.0
      %v639 = vmax.f32 %v593, 0.0
      %v640 = vmax.f32 %v498, 0.0
      %v641 = vmax.f32 %v547, 0.0
      %v642 = vmax.f32 %v596, 0.0
      %v643 = vmax.f32 %v500, 0.0
      %v644 = vmax.f32 %v549, 0.0
      %v645 = vmax.f32 %v598, 0.0
      %v646 = vmax.f32 %v503, 0.0
      %v647 = vmax.f32 %v552, 0.0
      %v648 = vmax.f32 %v601, 0.0
      %v649 = vmax.f32 %v505, 0.0
      %v650 = vmax.f32 %v554, 0.0
      %v651 = vmax.f32 %v603, 0.0
      %v652 = vmax.f32 %v508, 0.0
      %v653 = vmax.f32 %v557, 0.0
      %v654 = vmax.f32 %v606, 0.0
      %v655 = vmax.f32 %v510, 0.0
      %v656 = vmax.f32 %v559, 0.0
      %v657 = vmax.f32 %v608, 0.0
      %v658 = vld [vmem:[%s4] sm:$0x7]
      %v659 = vperm.slane %v658, 0
      %v660 = vperm.slane %v658, 1
      %v661 = vperm.slane %v658, 2
      %662 = vset.pattern.permute.xlu0 0
      %663 = vperm.xlu0 %662, %v294
      %v664 = vpop.permute.xlu0 %663
      %665 = vset.pattern.permute.xlu0 0
      %666 = vperm.xlu0 %665, %v295
      %v667 = vpop.permute.xlu0 %666
      %668 = vset.pattern.permute.xlu0 0
      %669 = vperm.xlu0 %668, %v296
      %v670 = vpop.permute.xlu0 %669
      %671 = vset.pattern.permute.xlu0 0
      %672 = vperm.xlu0 %671, %v297
      %v673 = vpop.permute.xlu0 %672
      %674 = vset.pattern.permute.xlu0 0
      %675 = vperm.xlu0 %674, %v298
      %v676 = vpop.permute.xlu0 %675
      %677 = vset.pattern.permute.xlu0 0
      %678 = vperm.xlu0 %677, %v299
      %v679 = vpop.permute.xlu0 %678
      %680 = vset.pattern.permute.xlu0 0
      %681 = vperm.xlu0 %680, %v300
      %v682 = vpop.permute.xlu0 %681
      %683 = vset.pattern.permute.xlu0 0
      %684 = vperm.xlu0 %683, %v301
      %v685 = vpop.permute.xlu0 %684
      %686 = vset.pattern.permute.xlu0 0
      %687 = vperm.xlu0 %686, %v302
      %v688 = vpop.permute.xlu0 %687
      %689 = vset.pattern.permute.xlu0 0
      %690 = vperm.xlu0 %689, %v303
      %v691 = vpop.permute.xlu0 %690
      %692 = vset.pattern.permute.xlu0 0
      %693 = vperm.xlu0 %692, %v304
      %v694 = vpop.permute.xlu0 %693
      %695 = vset.pattern.permute.xlu0 0
      %696 = vperm.xlu0 %695, %v305
      %v697 = vpop.permute.xlu0 %696
      %698 = vset.pattern.permute.xlu0 0
      %699 = vperm.xlu0 %698, %v306
      %v700 = vpop.permute.xlu0 %699
      %701 = vset.pattern.permute.xlu0 0
      %702 = vperm.xlu0 %701, %v307
      %v703 = vpop.permute.xlu0 %702
      %704 = vset.pattern.permute.xlu0 0
      %705 = vperm.xlu0 %704, %v308
      %v706 = vpop.permute.xlu0 %705
      %707 = vset.pattern.permute.xlu0 0
      %708 = vperm.xlu0 %707, %v309
      %v709 = vpop.permute.xlu0 %708
      %vm710 = vcmp.eq.s32.totalorder %v659, %v664
      %vm711 = vcmp.eq.s32.totalorder %v660, %v664
      %vm712 = vcmp.eq.s32.totalorder %v661, %v664
      %vm713 = vcmp.eq.s32.totalorder %v659, %v667
      %vm714 = vcmp.eq.s32.totalorder %v660, %v667
      %vm715 = vcmp.eq.s32.totalorder %v661, %v667
      %vm716 = vcmp.eq.s32.totalorder %v659, %v670
      %vm717 = vcmp.eq.s32.totalorder %v660, %v670
      %vm718 = vcmp.eq.s32.totalorder %v661, %v670
      %vm719 = vcmp.eq.s32.totalorder %v659, %v673
      %vm720 = vcmp.eq.s32.totalorder %v660, %v673
      %vm721 = vcmp.eq.s32.totalorder %v661, %v673
      %vm722 = vcmp.eq.s32.totalorder %v659, %v676
      %vm723 = vcmp.eq.s32.totalorder %v660, %v676
      %vm724 = vcmp.eq.s32.totalorder %v661, %v676
      %vm725 = vcmp.eq.s32.totalorder %v659, %v679
      %vm726 = vcmp.eq.s32.totalorder %v660, %v679
      %vm727 = vcmp.eq.s32.totalorder %v661, %v679
      %vm728 = vcmp.eq.s32.totalorder %v659, %v682
      %vm729 = vcmp.eq.s32.totalorder %v660, %v682
      %vm730 = vcmp.eq.s32.totalorder %v661, %v682
      %vm731 = vcmp.eq.s32.totalorder %v659, %v685
      %vm732 = vcmp.eq.s32.totalorder %v660, %v685
      %vm733 = vcmp.eq.s32.totalorder %v661, %v685
      %vm734 = vcmp.eq.s32.totalorder %v659, %v688
      %vm735 = vcmp.eq.s32.totalorder %v660, %v688
      %vm736 = vcmp.eq.s32.totalorder %v661, %v688
      %vm737 = vcmp.eq.s32.totalorder %v659, %v691
      %vm738 = vcmp.eq.s32.totalorder %v660, %v691
      %vm739 = vcmp.eq.s32.totalorder %v661, %v691
      %vm740 = vcmp.eq.s32.totalorder %v659, %v694
      %vm741 = vcmp.eq.s32.totalorder %v660, %v694
      %vm742 = vcmp.eq.s32.totalorder %v661, %v694
      %vm743 = vcmp.eq.s32.totalorder %v659, %v697
      %vm744 = vcmp.eq.s32.totalorder %v660, %v697
      %vm745 = vcmp.eq.s32.totalorder %v661, %v697
      %vm746 = vcmp.eq.s32.totalorder %v659, %v700
      %vm747 = vcmp.eq.s32.totalorder %v660, %v700
      %vm748 = vcmp.eq.s32.totalorder %v661, %v700
      %vm749 = vcmp.eq.s32.totalorder %v659, %v703
      %vm750 = vcmp.eq.s32.totalorder %v660, %v703
      %vm751 = vcmp.eq.s32.totalorder %v661, %v703
      %vm752 = vcmp.eq.s32.totalorder %v659, %v706
      %vm753 = vcmp.eq.s32.totalorder %v660, %v706
      %vm754 = vcmp.eq.s32.totalorder %v661, %v706
      %vm755 = vcmp.eq.s32.totalorder %v659, %v709
      %vm756 = vcmp.eq.s32.totalorder %v660, %v709
      %vm757 = vcmp.eq.s32.totalorder %v661, %v709
      %v758 = vsel %vm710, %v610, 0.0
      %v759 = vsel %vm711, %v611, 0.0
      %v760 = vsel %vm712, %v612, 0.0
      %v761 = vsel %vm713, %v613, 0.0
      %v762 = vsel %vm714, %v614, 0.0
      %v763 = vsel %vm715, %v615, 0.0
      %v764 = vsel %vm716, %v616, 0.0
      %v765 = vsel %vm717, %v617, 0.0
      %v766 = vsel %vm718, %v618, 0.0
      %v767 = vsel %vm719, %v619, 0.0
      %v768 = vsel %vm720, %v620, 0.0
      %v769 = vsel %vm721, %v621, 0.0
      %v770 = vsel %vm722, %v622, 0.0
      %v771 = vsel %vm723, %v623, 0.0
      %v772 = vsel %vm724, %v624, 0.0
      %v773 = vsel %vm725, %v625, 0.0
      %v774 = vsel %vm726, %v626, 0.0
      %v775 = vsel %vm727, %v627, 0.0
      %v776 = vsel %vm728, %v628, 0.0
      %v777 = vsel %vm729, %v629, 0.0
      %v778 = vsel %vm730, %v630, 0.0
      %v779 = vsel %vm731, %v631, 0.0
      %v780 = vsel %vm732, %v632, 0.0
      %v781 = vsel %vm733, %v633, 0.0
      %v782 = vsel %vm734, %v634, 0.0
      %v783 = vsel %vm735, %v635, 0.0
      %v784 = vsel %vm736, %v636, 0.0
      %v785 = vsel %vm737, %v637, 0.0
      %v786 = vsel %vm738, %v638, 0.0
      %v787 = vsel %vm739, %v639, 0.0
      %v788 = vsel %vm740, %v640, 0.0
      %v789 = vsel %vm741, %v641, 0.0
      %v790 = vsel %vm742, %v642, 0.0
      %v791 = vsel %vm743, %v643, 0.0
      %v792 = vsel %vm744, %v644, 0.0
      %v793 = vsel %vm745, %v645, 0.0
      %v794 = vsel %vm746, %v646, 0.0
      %v795 = vsel %vm747, %v647, 0.0
      %v796 = vsel %vm748, %v648, 0.0
      %v797 = vsel %vm749, %v649, 0.0
      %v798 = vsel %vm750, %v650, 0.0
      %v799 = vsel %vm751, %v651, 0.0
      %v800 = vsel %vm752, %v652, 0.0
      %v801 = vsel %vm753, %v653, 0.0
      %v802 = vsel %vm754, %v654, 0.0
      %v803 = vsel %vm755, %v655, 0.0
      %v804 = vsel %vm756, %v656, 0.0
      %v805 = vsel %vm757, %v657, 0.0
      %v806 = vpack.c.bf16 %v761, %v758
      %v807 = vpack.c.bf16 %v762, %v759
      %v808 = vpack.c.bf16 %v763, %v760
      %v809 = vpack.c.bf16 %v767, %v764
      %v810 = vpack.c.bf16 %v768, %v765
      %v811 = vpack.c.bf16 %v769, %v766
      %v812 = vpack.c.bf16 %v773, %v770
      %v813 = vpack.c.bf16 %v774, %v771
      %v814 = vpack.c.bf16 %v775, %v772
      %v815 = vpack.c.bf16 %v779, %v776
      %v816 = vpack.c.bf16 %v780, %v777
      %v817 = vpack.c.bf16 %v781, %v778
      %v818 = vpack.c.bf16 %v785, %v782
      %v819 = vpack.c.bf16 %v786, %v783
      %v820 = vpack.c.bf16 %v787, %v784
      %v821 = vpack.c.bf16 %v791, %v788
      %v822 = vpack.c.bf16 %v792, %v789
      %v823 = vpack.c.bf16 %v793, %v790
      %v824 = vpack.c.bf16 %v797, %v794
      %v825 = vpack.c.bf16 %v798, %v795
      %v826 = vpack.c.bf16 %v799, %v796
      %v827 = vpack.c.bf16 %v803, %v800
      %v828 = vpack.c.bf16 %v804, %v801
      %v829 = vpack.c.bf16 %v805, %v802
      %v830 = vld [vmem:[%s5] sm:$0xf]
      %v831 = vld [vmem:[%s5 + $0x4] sm:$0xf]
      %v832 = vld [vmem:[%s5 + $0x8] sm:$0xf]
      %v833 = vld [vmem:[%s5 + $0xc] sm:$0xf]
      %v834 = vld [vmem:[%s5 + $0x10] sm:$0xf]
      %v835 = vld [vmem:[%s5 + $0x14] sm:$0xf]
      %v836 = vld [vmem:[%s5 + $0x18] sm:$0xf]
      %v837 = vld [vmem:[%s5 + $0x1c] sm:$0xf]
      %v838 = vld [vmem:[%s5 + $0x20] sm:$0xf]
      %v839 = vld [vmem:[%s5 + $0x24] sm:$0xf]
      %v840 = vld [vmem:[%s5 + $0x28] sm:$0xf]
      %v841 = vld [vmem:[%s5 + $0x2c] sm:$0xf]
      %v842 = vld [vmem:[%s5 + $0x30] sm:$0xf]
      %v843 = vld [vmem:[%s5 + $0x34] sm:$0xf]
      %v844 = vld [vmem:[%s5 + $0x38] sm:$0xf]
      %v845 = vld [vmem:[%s5 + $0x3c] sm:$0xf]
      %v846 = vld [vmem:[%s5 + $0x40] sm:$0xf]
      %v847 = vld [vmem:[%s5 + $0x44] sm:$0xf]
      %v848 = vld [vmem:[%s5 + $0x48] sm:$0xf]
      %v849 = vld [vmem:[%s5 + $0x4c] sm:$0xf]
      %v850 = vld [vmem:[%s5 + $0x50] sm:$0xf]
      %v851 = vld [vmem:[%s5 + $0x54] sm:$0xf]
      %v852 = vld [vmem:[%s5 + $0x58] sm:$0xf]
      %v853 = vld [vmem:[%s5 + $0x5c] sm:$0xf]
      %v854 = vld [vmem:[%s5 + $0x60] sm:$0xf]
      %v855 = vld [vmem:[%s5 + $0x64] sm:$0xf]
      %v856 = vld [vmem:[%s5 + $0x68] sm:$0xf]
      %v857 = vld [vmem:[%s5 + $0x6c] sm:$0xf]
      %v858 = vld [vmem:[%s5 + $0x70] sm:$0xf]
      %v859 = vld [vmem:[%s5 + $0x74] sm:$0xf]
      %v860 = vld [vmem:[%s5 + $0x78] sm:$0xf]
      %v861 = vld [vmem:[%s5 + $0x7c] sm:$0xf]
      %v862 = vld [vmem:[%s5 + $0x80] sm:$0xf]
      %v863 = vld [vmem:[%s5 + $0x84] sm:$0xf]
      %v864 = vld [vmem:[%s5 + $0x88] sm:$0xf]
      %v865 = vld [vmem:[%s5 + $0x8c] sm:$0xf]
      %v866 = vld [vmem:[%s5 + $0x90] sm:$0xf]
      %v867 = vld [vmem:[%s5 + $0x94] sm:$0xf]
      %v868 = vld [vmem:[%s5 + $0x98] sm:$0xf]
      %v869 = vld [vmem:[%s5 + $0x9c] sm:$0xf]
      %v870 = vld [vmem:[%s5 + $0xa0] sm:$0xf]
      %v871 = vld [vmem:[%s5 + $0xa4] sm:$0xf]
      %v872 = vld [vmem:[%s5 + $0xa8] sm:$0xf]
      %v873 = vld [vmem:[%s5 + $0xac] sm:$0xf]
      %v874 = vld [vmem:[%s5 + $0xb0] sm:$0xf]
      %v875 = vld [vmem:[%s5 + $0xb4] sm:$0xf]
      %v876 = vld [vmem:[%s5 + $0xb8] sm:$0xf]
      %v877 = vld [vmem:[%s5 + $0xbc] sm:$0xf]
      %v926 = vunpack.c.l.b16 %v830
      %v927 = vunpack.c.l.b16 %v831
      %v928 = vunpack.c.l.b16 %v832
      %v929 = vunpack.c.l.b16 %v833
      %v930 = vunpack.c.l.b16 %v834
      %v931 = vunpack.c.l.b16 %v835
      %v932 = vunpack.c.l.b16 %v836
      %v933 = vunpack.c.l.b16 %v837
      %v934 = vunpack.c.l.b16 %v838
      %v935 = vunpack.c.l.b16 %v839
      %v936 = vunpack.c.l.b16 %v840
      %v937 = vunpack.c.l.b16 %v841
      %v938 = vunpack.c.l.b16 %v842
      %v939 = vunpack.c.l.b16 %v843
      %v940 = vunpack.c.l.b16 %v844
      %v941 = vunpack.c.l.b16 %v845
      %v942 = vunpack.c.l.b16 %v846
      %v943 = vunpack.c.l.b16 %v847
      %v944 = vunpack.c.l.b16 %v848
      %v945 = vunpack.c.l.b16 %v849
      %v946 = vunpack.c.l.b16 %v850
      %v947 = vunpack.c.l.b16 %v851
      %v948 = vunpack.c.l.b16 %v852
      %v949 = vunpack.c.l.b16 %v853
      %v950 = vunpack.c.l.b16 %v854
      %v951 = vunpack.c.l.b16 %v855
      %v952 = vunpack.c.l.b16 %v856
      %v953 = vunpack.c.l.b16 %v857
      %v954 = vunpack.c.l.b16 %v858
      %v955 = vunpack.c.l.b16 %v859
      %v956 = vunpack.c.l.b16 %v860
      %v957 = vunpack.c.l.b16 %v861
      %v958 = vunpack.c.l.b16 %v862
      %v959 = vunpack.c.l.b16 %v863
      %v960 = vunpack.c.l.b16 %v864
      %v961 = vunpack.c.l.b16 %v865
      %v962 = vunpack.c.l.b16 %v866
      %v963 = vunpack.c.l.b16 %v867
      %v964 = vunpack.c.l.b16 %v868
      %v965 = vunpack.c.l.b16 %v869
      %v966 = vunpack.c.l.b16 %v870
      %v967 = vunpack.c.l.b16 %v871
      %v968 = vunpack.c.l.b16 %v872
      %v969 = vunpack.c.l.b16 %v873
      %v970 = vunpack.c.l.b16 %v874
      %v971 = vunpack.c.l.b16 %v875
      %v972 = vunpack.c.l.b16 %v876
      %v973 = vunpack.c.l.b16 %v877
      %v974 = vpack.c.b16 %v927, %v926
      %v975 = vpack.c.b16 %v929, %v928
      %v976 = vpack.c.b16 %v931, %v930
      %v977 = vpack.c.b16 %v933, %v932
      %v978 = vpack.c.b16 %v935, %v934
      %v979 = vpack.c.b16 %v937, %v936
      %v980 = vpack.c.b16 %v939, %v938
      %v981 = vpack.c.b16 %v941, %v940
      %v982 = vpack.c.b16 %v943, %v942
      %v983 = vpack.c.b16 %v945, %v944
      %v984 = vpack.c.b16 %v947, %v946
      %v985 = vpack.c.b16 %v949, %v948
      %v986 = vpack.c.b16 %v951, %v950
      %v987 = vpack.c.b16 %v953, %v952
      %v988 = vpack.c.b16 %v955, %v954
      %v989 = vpack.c.b16 %v957, %v956
      %v990 = vpack.c.b16 %v959, %v958
      %v991 = vpack.c.b16 %v961, %v960
      %v992 = vpack.c.b16 %v963, %v962
      %v993 = vpack.c.b16 %v965, %v964
      %v994 = vpack.c.b16 %v967, %v966
      %v995 = vpack.c.b16 %v969, %v968
      %v996 = vpack.c.b16 %v971, %v970
      %v997 = vpack.c.b16 %v973, %v972
      %1022 = vmatpush.bf16.msra.mxu0 %v981
      %1023 = vmatpush.bf16.msra.mxu0 %v980
      %1024 = vmatpush.bf16.msra.mxu0 %v979
      %1025 = vmatpush.bf16.msra.mxu0 %v978
      %1026 = vmatpush.bf16.msra.mxu0 %v977
      %1027 = vmatpush.bf16.msra.mxu0 %v976
      %1028 = vmatpush.bf16.msra.mxu0 %v975
      %1029 = vmatpush.bf16.msra.mxu0 %v974
      %1030 = vmatmul.bf16.gmra.mxu0 %v806
      %v1031 = vpop.f32.mrf.mxu0
      %v1032 = vadd.f32 0.0, %v1031
      %v1033 = vpop.f32.mrf.mxu0
      %v1034 = vadd.f32 0.0, %v1033
      %1035 = vmatmul.bf16.gmra.mxu0 %v809
      %v1036 = vpop.f32.mrf.mxu0
      %v1037 = vadd.f32 0.0, %v1036
      %v1038 = vpop.f32.mrf.mxu0
      %v1039 = vadd.f32 0.0, %v1038
      %1040 = vmatmul.bf16.gmra.mxu0 %v812
      %v1041 = vpop.f32.mrf.mxu0
      %v1042 = vadd.f32 0.0, %v1041
      %v1043 = vpop.f32.mrf.mxu0
      %v1044 = vadd.f32 0.0, %v1043
      %1045 = vmatmul.bf16.gmra.mxu0 %v815
      %v1046 = vpop.f32.mrf.mxu0
      %v1047 = vadd.f32 0.0, %v1046
      %v1048 = vpop.f32.mrf.mxu0
      %v1049 = vadd.f32 0.0, %v1048
      %1050 = vmatmul.bf16.gmra.mxu0 %v818
      %v1051 = vpop.f32.mrf.mxu0
      %v1052 = vadd.f32 0.0, %v1051
      %v1053 = vpop.f32.mrf.mxu0
      %v1054 = vadd.f32 0.0, %v1053
      %1055 = vmatmul.bf16.gmra.mxu0 %v821
      %v1056 = vpop.f32.mrf.mxu0
      %v1057 = vadd.f32 0.0, %v1056
      %v1058 = vpop.f32.mrf.mxu0
      %v1059 = vadd.f32 0.0, %v1058
      %1060 = vmatmul.bf16.gmra.mxu0 %v824
      %v1061 = vpop.f32.mrf.mxu0
      %v1062 = vadd.f32 0.0, %v1061
      %v1063 = vpop.f32.mrf.mxu0
      %v1064 = vadd.f32 0.0, %v1063
      %1065 = vmatmul.bf16.gmra.mxu0 %v827
      %v1066 = vpop.f32.mrf.mxu0
      %v1067 = vadd.f32 0.0, %v1066
      %v1068 = vpop.f32.mrf.mxu0
      %v1069 = vadd.f32 0.0, %v1068
      %1070 = vdwg.mxu0
      %1071 = vmatpush.bf16.msra.mxu0 %v989
      %1072 = vmatpush.bf16.msra.mxu0 %v988
      %1073 = vmatpush.bf16.msra.mxu0 %v987
      %1074 = vmatpush.bf16.msra.mxu0 %v986
      %1075 = vmatpush.bf16.msra.mxu0 %v985
      %1076 = vmatpush.bf16.msra.mxu0 %v984
      %1077 = vmatpush.bf16.msra.mxu0 %v983
      %1078 = vmatpush.bf16.msra.mxu0 %v982
      %1079 = vmatmul.bf16.gmra.mxu0 %v807
      %v1080 = vpop.f32.mrf.mxu0
      %v1081 = vadd.f32 %v1032, %v1080
      %v1082 = vpop.f32.mrf.mxu0
      %v1083 = vadd.f32 %v1034, %v1082
      %1084 = vmatmul.bf16.gmra.mxu0 %v810
      %v1085 = vpop.f32.mrf.mxu0
      %v1086 = vadd.f32 %v1037, %v1085
      %v1087 = vpop.f32.mrf.mxu0
      %v1088 = vadd.f32 %v1039, %v1087
      %1089 = vmatmul.bf16.gmra.mxu0 %v813
      %v1090 = vpop.f32.mrf.mxu0
      %v1091 = vadd.f32 %v1042, %v1090
      %v1092 = vpop.f32.mrf.mxu0
      %v1093 = vadd.f32 %v1044, %v1092
      %1094 = vmatmul.bf16.gmra.mxu0 %v816
      %v1095 = vpop.f32.mrf.mxu0
      %v1096 = vadd.f32 %v1047, %v1095
      %v1097 = vpop.f32.mrf.mxu0
      %v1098 = vadd.f32 %v1049, %v1097
      %1099 = vmatmul.bf16.gmra.mxu0 %v819
      %v1100 = vpop.f32.mrf.mxu0
      %v1101 = vadd.f32 %v1052, %v1100
      %v1102 = vpop.f32.mrf.mxu0
      %v1103 = vadd.f32 %v1054, %v1102
      %1104 = vmatmul.bf16.gmra.mxu0 %v822
      %v1105 = vpop.f32.mrf.mxu0
      %v1106 = vadd.f32 %v1057, %v1105
      %v1107 = vpop.f32.mrf.mxu0
      %v1108 = vadd.f32 %v1059, %v1107
      %1109 = vmatmul.bf16.gmra.mxu0 %v825
      %v1110 = vpop.f32.mrf.mxu0
      %v1111 = vadd.f32 %v1062, %v1110
      %v1112 = vpop.f32.mrf.mxu0
      %v1113 = vadd.f32 %v1064, %v1112
      %1114 = vmatmul.bf16.gmra.mxu0 %v828
      %v1115 = vpop.f32.mrf.mxu0
      %v1116 = vadd.f32 %v1067, %v1115
      %v1117 = vpop.f32.mrf.mxu0
      %v1118 = vadd.f32 %v1069, %v1117
      %1119 = vdwg.mxu0
      %1120 = vmatpush.bf16.msra.mxu0 %v997
      %1121 = vmatpush.bf16.msra.mxu0 %v996
      %1122 = vmatpush.bf16.msra.mxu0 %v995
      %1123 = vmatpush.bf16.msra.mxu0 %v994
      %1124 = vmatpush.bf16.msra.mxu0 %v993
      %1125 = vmatpush.bf16.msra.mxu0 %v992
      %1126 = vmatpush.bf16.msra.mxu0 %v991
      %1127 = vmatpush.bf16.msra.mxu0 %v990
      %1128 = vmatmul.bf16.gmra.mxu0 %v808
      %v1129 = vpop.f32.mrf.mxu0
      %v1130 = vadd.f32 %v1081, %v1129
      %v1131 = vpop.f32.mrf.mxu0
      %v1132 = vadd.f32 %v1083, %v1131
      %1133 = vmatmul.bf16.gmra.mxu0 %v811
      %v1134 = vpop.f32.mrf.mxu0
      %v1135 = vadd.f32 %v1086, %v1134
      %v1136 = vpop.f32.mrf.mxu0
      %v1137 = vadd.f32 %v1088, %v1136
      %1138 = vmatmul.bf16.gmra.mxu0 %v814
      %v1139 = vpop.f32.mrf.mxu0
      %v1140 = vadd.f32 %v1091, %v1139
      %v1141 = vpop.f32.mrf.mxu0
      %v1142 = vadd.f32 %v1093, %v1141
      %1143 = vmatmul.bf16.gmra.mxu0 %v817
      %v1144 = vpop.f32.mrf.mxu0
      %v1145 = vadd.f32 %v1096, %v1144
      %v1146 = vpop.f32.mrf.mxu0
      %v1147 = vadd.f32 %v1098, %v1146
      %1148 = vmatmul.bf16.gmra.mxu0 %v820
      %v1149 = vpop.f32.mrf.mxu0
      %v1150 = vadd.f32 %v1101, %v1149
      %v1151 = vpop.f32.mrf.mxu0
      %v1152 = vadd.f32 %v1103, %v1151
      %1153 = vmatmul.bf16.gmra.mxu0 %v823
      %v1154 = vpop.f32.mrf.mxu0
      %v1155 = vadd.f32 %v1106, %v1154
      %v1156 = vpop.f32.mrf.mxu0
      %v1157 = vadd.f32 %v1108, %v1156
      %1158 = vmatmul.bf16.gmra.mxu0 %v826
      %v1159 = vpop.f32.mrf.mxu0
      %v1160 = vadd.f32 %v1111, %v1159
      %v1161 = vpop.f32.mrf.mxu0
      %v1162 = vadd.f32 %v1113, %v1161
      %1163 = vmatmul.bf16.gmra.mxu0 %v829
      %v1164 = vpop.f32.mrf.mxu0
      %v1165 = vadd.f32 %v1116, %v1164
      %v1166 = vpop.f32.mrf.mxu0
      %v1167 = vadd.f32 %v1118, %v1166
      %1168 = vdwg.mxu0
      %1169 = vst.msk [vmem:[%s275] sm:$0xff] %vm438, %v1130
      %1170 = vst.msk [vmem:[%s275 + $0x8] sm:$0xff] %vm438, %v1132
      %1171 = vst.msk [vmem:[%s275 + $0x10] sm:$0xff] %vm438, %v1135
      %1172 = vst.msk [vmem:[%s275 + $0x18] sm:$0xff] %vm438, %v1137
      %1173 = vst.msk [vmem:[%s275 + $0x20] sm:$0xff] %vm438, %v1140
      %1174 = vst.msk [vmem:[%s275 + $0x28] sm:$0xff] %vm438, %v1142
      %1175 = vst.msk [vmem:[%s275 + $0x30] sm:$0xff] %vm438, %v1145
      %1176 = vst.msk [vmem:[%s275 + $0x38] sm:$0xff] %vm438, %v1147
      %1177 = vst.msk [vmem:[%s275 + $0x40] sm:$0xff] %vm438, %v1150
      %1178 = vst.msk [vmem:[%s275 + $0x48] sm:$0xff] %vm438, %v1152
      %1179 = vst.msk [vmem:[%s275 + $0x50] sm:$0xff] %vm438, %v1155
      %1180 = vst.msk [vmem:[%s275 + $0x58] sm:$0xff] %vm438, %v1157
      %1181 = vst.msk [vmem:[%s275 + $0x60] sm:$0xff] %vm438, %v1160
      %1182 = vst.msk [vmem:[%s275 + $0x68] sm:$0xff] %vm438, %v1162
      %1183 = vst.msk [vmem:[%s275 + $0x70] sm:$0xff] %vm438, %v1165
      %1184 = vst.msk [vmem:[%s275 + $0x78] sm:$0xff] %vm438, %v1167
      %s1185 = smul.u32 16, %s17
      %p1186 = scmp.lt.s32.totalorder %s1185, 63
      %s1187 = scalar_select %p1186, %s1185, 63
      %s1188 = smul.addr %s1187, 8
      %s1189 = scalar_lea.vmem %s6, %s1188
      // Predicated region
      $region45: #{decoder_1.1} parent=43 // pred_check
        %p1190 = pneg %p171
      $region46: #{decoder_1.1} parent=43 // pred_check_branch
        %1192 = sbr.rel (%p1190) target = $region48
      $region47: #{decoder_1.1} parent=43 // pred_region
        %s1193 = smul.u32 16, %s17
      $region48: #{decoder_1.1} parent=43 // pred_fallthru
        _
    $region44: #{decoder_1.1} parent=5 // pred_fallthru
      _
    %p1194 = scmp.le.s32.totalorder 2, %s12
    // Predicated region
    $region49: #{decoder_1.1} parent=5 // pred_check
      %p1195 = pneg %p1194
    $region50: #{decoder_1.1} parent=5 // pred_check_branch
      %1197 = sbr.rel (%p1195) target = $region52
    $region51: #{decoder_1.1} parent=5 // pred_region
      %s1198 = ssub.s32 %s12, 2
      // Predicated region
      $region53: #{decoder_1.1} parent=51 // pred_check
        %p1199 = pneg %p177
      $region54: #{decoder_1.1} parent=51 // pred_check_branch
        %1201 = sbr.rel (%p1199) target = $region56
      $region55: #{decoder_1.1} parent=51 // pred_region
        %s1202 = smul.u32 16, %s18
        %p1203 = scmp.lt.s32.totalorder %s1202, 63
        %s1204 = scalar_select %p1203, %s1202, 63
        %s1205 = smul.addr %s1204, 8
        %s1206 = scalar_lea.vmem %s6, %s1205
      $region56: #{decoder_1.1} parent=51 // pred_fallthru
        _
    $region52: #{decoder_1.1} parent=5 // pred_fallthru
      _
  $region6: #{decoder_1.1} parent=0 // loop_footer
    %s16 = sadd.s32 1, %s12
  $region7: #{decoder_1.1} parent=0 // loop_footer_branch
    %11 = sbr.rel target = $region3
  $region8: #{decoder_1.1} parent=0 // loop_exit
    _

</llo_original>
